<compile_context>
chip_gen: v7x
topology: tpu7x:2x2x1
jax: 0.10.0
libtpu: 0.0.40
codegen_flags: <defaults>
</compile_context>

<pallas_src>
import functools

import jax
import jax.numpy as jnp
from jax.experimental import pallas as pl
from jax.experimental.pallas import tpu as pltpu


def mlp_kernel(x_ref, w1_ref, b1_ref, w2_ref, b2_ref, o_ref):
    # x_ref : (9,  TB) bf16   w1_ref: (H, 9) bf16   b1_ref: (H, 1) f32
    # w2_ref: (9,  H ) bf16   b2_ref: (9, 1) f32    o_ref : (9, TB) f32
    # Hidden layer: (H, 9) @ (9, TB) -> (H, TB), f32 accumulate on the MXU.
    h = jnp.dot(w1_ref[...], x_ref[...], preferred_element_type=jnp.float32)
    h = jnp.maximum(h + b1_ref[...], 0.0)            # bias + ReLU in f32 (v5e-safe)
    # Output layer: (9, H) @ (H, TB) -> (9, TB) logits, lane-dense store.
    out = jnp.dot(w2_ref[...], h.astype(jnp.bfloat16),
                  preferred_element_type=jnp.float32)
    o_ref[...] = out + b2_ref[...]


def custom_policy_net_forward(x, params, *, block_b=2048):
    """x: (B, 9) float32 board states. Returns (B, 9) float32 logits.

    params: dict with w1 (H, 9), b1 (H,), w2 (9, H), b2 (9,)  (PyTorch layout).
    block_b: batch rows per grid step (multiple of 128); sized well within the
             32 MiB scoped-VMEM budget even on v7x (x+out double buffers at
             TB=2048 are < 1 MiB total).
    """
    w1, b1, w2, b2 = params["w1"], params["b1"], params["w2"], params["b2"]
    H = w1.shape[0]
    B = x.shape[0]
    assert block_b % 128 == 0

    # Tile size: big batches use block_b; small ones round up to one 128-lane tile.
    tb = min(block_b, pl.cdiv(max(B, 1), 128) * 128)
    Bp = pl.cdiv(B, tb) * tb

    # Layout plumbing (outside the kernel): pad batch, go feature-major, cast
    # the streamed operands to bf16. Biases stay f32 columns for broadcast.
    xT = jnp.pad(x, ((0, Bp - B), (0, 0))).T.astype(jnp.bfloat16)   # (9, Bp)
    w1b = w1.astype(jnp.bfloat16)                                    # (H, 9)
    w2b = w2.astype(jnp.bfloat16)                                    # (9, H)
    b1c = b1.reshape(H, 1).astype(jnp.float32)                       # (H, 1)
    b2c = b2.reshape(9, 1).astype(jnp.float32)                       # (9, 1)

    out_T = pl.pallas_call(
        mlp_kernel,
        out_shape=jax.ShapeDtypeStruct((9, Bp), jnp.float32),
        grid=(Bp // tb,),
        in_specs=[
            pl.BlockSpec((9, tb), lambda i: (0, i)),    # x tile, pipelined
            pl.BlockSpec((H, 9), lambda i: (0, 0)),     # W1: VMEM-resident
            pl.BlockSpec((H, 1), lambda i: (0, 0)),     # b1: VMEM-resident
            pl.BlockSpec((9, H), lambda i: (0, 0)),     # W2: VMEM-resident
            pl.BlockSpec((9, 1), lambda i: (0, 0)),     # b2: VMEM-resident
        ],
        out_specs=pl.BlockSpec((9, tb), lambda i: (0, i)),  # lane-dense logits
        compiler_params=pltpu.CompilerParams(
            dimension_semantics=("parallel",),          # megacore shard on v7x
        ),
    )(xT, w1b, b1c, w2b, b2c)

    return out_T.T[:B]                                   # back to (B, 9)


def init_params(key, hidden_sizes=(32,), in_dim=9, out_dim=9):
    """nn.Linear-style init: weight (out, in), uniform(-1/sqrt(fan_in), +)."""
    assert len(hidden_sizes) == 1, "kernel is specialized for a single hidden layer"
    H = hidden_sizes[0]
    k1, k2, k3, k4 = jax.random.split(key, 4)
    bound1 = 1.0 / jnp.sqrt(in_dim)
    bound2 = 1.0 / jnp.sqrt(H)
    w1 = jax.random.uniform(k1, (H, in_dim), jnp.float32, -bound1, bound1)
    b1 = jax.random.uniform(k2, (H,), jnp.float32, -bound1, bound1)
    w2 = jax.random.uniform(k3, (out_dim, H), jnp.float32, -bound2, bound2)
    b2 = jax.random.uniform(k4, (out_dim,), jnp.float32, -bound2, bound2)
    return {"w1": w1, "b1": b1, "w2": w2, "b2": b2}


def reference_forward(x, params):
    """Plain-JAX reference mirroring the kernel's bf16-in / f32-accumulate math."""
    w1 = params["w1"].astype(jnp.bfloat16)     # (H, 9)
    w2 = params["w2"].astype(jnp.bfloat16)     # (9, H)
    h = jnp.dot(x.astype(jnp.bfloat16), w1.T, preferred_element_type=jnp.float32)
    h = jnp.maximum(h + params["b1"][None, :], 0.0)
    out = jnp.dot(h.astype(jnp.bfloat16), w2.T, preferred_element_type=jnp.float32)
    return out + params["b2"][None, :]


if __name__ == "__main__":
    key = jax.random.PRNGKey(0)
    kp, kx1, kx2 = jax.random.split(key, 3)

    params = init_params(kp, hidden_sizes=(32,))

    # Small demo batch: 8 flattened 3x3 Tic-Tac-Toe boards (values in {-1,0,1}).
    B = 8
    x = jax.random.randint(kx1, (B, 9), -1, 2).astype(jnp.float32)

    out = custom_policy_net_forward(x, params)
    out = jax.block_until_ready(out)
    ref = reference_forward(x, params)
    assert out.shape == (B, 9)
    assert jnp.allclose(out, ref, atol=1e-3, rtol=1e-3), "mismatch vs JAX reference"

    # Second check: non-multiple-of-128 batch with a multi-step grid (pad + tile path).
    B2 = 300
    x2 = jax.random.randint(kx2, (B2, 9), -1, 2).astype(jnp.float32)
    out2 = jax.block_until_ready(
        custom_policy_net_forward(x2, params, block_b=128))
    ref2 = reference_forward(x2, params)
    assert out2.shape == (B2, 9)
    assert jnp.allclose(out2, ref2, atol=1e-3, rtol=1e-3), "mismatch vs JAX reference (tiled)"

    print("KERNEL_OK")
</pallas_src>

<mosaic_0001>
module attributes {stable_mosaic.version = 11 : i64} {
  func.func @mlp_kernel(%arg0: i32, %arg1: memref<9x128xbf16, #tpu.memory_space<vmem>>, %arg2: memref<32x9xbf16, #tpu.memory_space<vmem>>, %arg3: memref<32x1xf32, #tpu.memory_space<vmem>>, %arg4: memref<9x32xbf16, #tpu.memory_space<vmem>>, %arg5: memref<9x1xf32, #tpu.memory_space<vmem>>, %arg6: memref<9x128xf32, #tpu.memory_space<vmem>>) attributes {dimension_semantics = [#tpu.dimension_semantics<parallel>], iteration_bounds = array<i64: 1>, scalar_prefetch = 0 : i64, scratch_operands = 0 : i64, tpu.core_type = #tpu.core_type<tc>, window_params = [{transform_indices = @transform_0, window_bounds = array<i64: 9, 128>}, {pipeline_mode = #tpu.pipeline_mode<synchronous>, transform_indices = @transform_1, window_bounds = array<i64: 32, 9>}, {pipeline_mode = #tpu.pipeline_mode<synchronous>, transform_indices = @transform_2, window_bounds = array<i64: 32, 1>}, {pipeline_mode = #tpu.pipeline_mode<synchronous>, transform_indices = @transform_3, window_bounds = array<i64: 9, 32>}, {pipeline_mode = #tpu.pipeline_mode<synchronous>, transform_indices = @transform_4, window_bounds = array<i64: 9, 1>}, {transform_indices = @transform_5, window_bounds = array<i64: 9, 128>}]} {
    %c0 = arith.constant 0 : index
    %c0_0 = arith.constant 0 : index
    %0 = vector.load %arg2[%c0, %c0_0] : memref<32x9xbf16, #tpu.memory_space<vmem>>, vector<32x9xbf16>
    %c0_1 = arith.constant 0 : index
    %c0_2 = arith.constant 0 : index
    %1 = vector.load %arg1[%c0_1, %c0_2] : memref<9x128xbf16, #tpu.memory_space<vmem>>, vector<9x128xbf16>
    %cst = arith.constant dense<0.000000e+00> : vector<32x128xf32>
    %2 = tpu.matmul %0, %1, %cst {dimension_numbers = #tpu.dot_dimension_numbers<[1], [0], [0], [1], [0, 0, 1, 1], [], []>} : vector<32x9xbf16>, vector<9x128xbf16>, vector<32x128xf32> -> vector<32x128xf32>
    %c0_3 = arith.constant 0 : index
    %c0_4 = arith.constant 0 : index
    %3 = vector.load %arg3[%c0_3, %c0_4] : memref<32x1xf32, #tpu.memory_space<vmem>>, vector<32x1xf32>
    %4 = vector.broadcast %3 : vector<32x1xf32> to vector<32x128xf32>
    %5 = arith.addf %2, %4 : vector<32x128xf32>
    %cst_5 = arith.constant 0.000000e+00 : f32
    %6 = vector.broadcast %cst_5 : f32 to vector<32x128xf32>
    %7 = arith.maximumf %5, %6 : vector<32x128xf32>
    %c0_6 = arith.constant 0 : index
    %c0_7 = arith.constant 0 : index
    %8 = vector.load %arg4[%c0_6, %c0_7] : memref<9x32xbf16, #tpu.memory_space<vmem>>, vector<9x32xbf16>
    %9 = arith.truncf %7 : vector<32x128xf32> to vector<32x128xbf16>
    %cst_8 = arith.constant dense<0.000000e+00> : vector<9x128xf32>
    %10 = tpu.matmul %8, %9, %cst_8 {dimension_numbers = #tpu.dot_dimension_numbers<[1], [0], [0], [1], [0, 0, 1, 1], [], []>} : vector<9x32xbf16>, vector<32x128xbf16>, vector<9x128xf32> -> vector<9x128xf32>
    %c0_9 = arith.constant 0 : index
    %c0_10 = arith.constant 0 : index
    %11 = vector.load %arg5[%c0_9, %c0_10] : memref<9x1xf32, #tpu.memory_space<vmem>>, vector<9x1xf32>
    %12 = vector.broadcast %11 : vector<9x1xf32> to vector<9x128xf32>
    %13 = arith.addf %10, %12 : vector<9x128xf32>
    %c0_11 = arith.constant 0 : index
    %c0_12 = arith.constant 0 : index
    %14 = vector.load %arg6[%c0_11, %c0_12] : memref<9x128xf32, #tpu.memory_space<vmem>>, vector<9x128xf32>
    tpu.vector_store %arg6[%c0_11, %c0_12], %13 {strides = array<i32>} : memref<9x128xf32, #tpu.memory_space<vmem>>, vector<9x128xf32>,
    return
  }
  func.func @transform_0(%arg0: i32) -> (i32, i32) {
    %c0_i32 = arith.constant 0 : i32
    %c0_i32_0 = arith.constant 0 : i32
    return %c0_i32, %arg0 : i32, i32
  }
  func.func @transform_1(%arg0: i32) -> (i32, i32) {
    %c0_i32 = arith.constant 0 : i32
    %c0_i32_0 = arith.constant 0 : i32
    %c0_i32_1 = arith.constant 0 : i32
    return %c0_i32, %c0_i32_0 : i32, i32
  }
  func.func @transform_2(%arg0: i32) -> (i32, i32) {
    %c0_i32 = arith.constant 0 : i32
    %c0_i32_0 = arith.constant 0 : i32
    %c0_i32_1 = arith.constant 0 : i32
    return %c0_i32, %c0_i32_0 : i32, i32
  }
  func.func @transform_3(%arg0: i32) -> (i32, i32) {
    %c0_i32 = arith.constant 0 : i32
    %c0_i32_0 = arith.constant 0 : i32
    %c0_i32_1 = arith.constant 0 : i32
    return %c0_i32, %c0_i32_0 : i32, i32
  }
  func.func @transform_4(%arg0: i32) -> (i32, i32) {
    %c0_i32 = arith.constant 0 : i32
    %c0_i32_0 = arith.constant 0 : i32
    %c0_i32_1 = arith.constant 0 : i32
    return %c0_i32, %c0_i32_0 : i32, i32
  }
  func.func @transform_5(%arg0: i32) -> (i32, i32) {
    %c0_i32 = arith.constant 0 : i32
    %c0_i32_0 = arith.constant 0 : i32
    return %c0_i32, %arg0 : i32, i32
  }
}

</mosaic_0001>

<llo_original>
// kernel: tpu_custom_call.1
$region0: #{tpu_custom_call.1}
  #allocation0 [shape = 'u32[]', space=smem, size = 0x4, offset = 0x4, fixed_abs, tag = 'smem constant byte address 0x4 - core index']
  #allocation1 [shape = 'u32[144,128]{1,0:T(1,128)}', space=vmem, size = 0x12000, scoped, tag = 'internal scratch']
  %s0 = inlined_call_operand.vmem [shape: bf16[9,128], index: 0, kind: input, shape index: {}]
  %s1 = inlined_call_operand.vmem [shape: bf16[32,9], index: 1, kind: input, shape index: {}]
  %s2 = inlined_call_operand.vmem [shape: f32[32,1], index: 2, kind: input, shape index: {}]
  %s3 = inlined_call_operand.vmem [shape: bf16[9,32], index: 3, kind: input, shape index: {}]
  %s4 = inlined_call_operand.vmem [shape: f32[9,1], index: 4, kind: input, shape index: {}]
  %s5 = inlined_call_operand.hbm [shape: f32[9,128], index: 5, kind: output, shape index: {}]
  %s6 = sld [smem:[#allocation0]]
  $region30: #{tpu_custom_call.1} parent=0
    _
  %s8 = ssub.s32 1, %s6
  %s9 = scalar_select 0, %s8, %s6
  $region1: #{tpu_custom_call.1} parent=0
    #allocation2 [shape = 'u8[8192]{0}', space=vmem, size = 0x2000, scoped, tag = 'output window, operand 0, single buffered']
    #allocation3 [shape = 's32[1]{0}', space=sflag, size = 0x4, scoped, tag = 'scoped memory for tpu_custom_call.1']
    %10 = vsyncpa [#allocation3], 0
    // Predicated region
    $region2: #{tpu_custom_call.1} parent=1 // pred_check
      _
    $region3: #{tpu_custom_call.1} parent=1 // pred_check_branch
      %12 = sbr.rel (0) target = $region5
    $region4: #{tpu_custom_call.1} parent=1 // pred_region
      _
    $region5: #{tpu_custom_call.1} parent=1 // pred_fallthru
      _
    // Predicated region
    $region6: #{tpu_custom_call.1} parent=1 // pred_check
      _
    $region7: #{tpu_custom_call.1} parent=1 // pred_check_branch
      %14 = sbr.rel (0) target = $region9
    $region8: #{tpu_custom_call.1} parent=1 // pred_region
      _
    $region9: #{tpu_custom_call.1} parent=1 // pred_fallthru
      _
    // Predicated region
    $region10: #{tpu_custom_call.1} parent=1 // pred_check
      _
    $region11: #{tpu_custom_call.1} parent=1 // pred_check_branch
      %16 = sbr.rel (0) target = $region13
    $region12: #{tpu_custom_call.1} parent=1 // pred_region
      _
    $region13: #{tpu_custom_call.1} parent=1 // pred_fallthru
      _
    // Predicated region
    $region14: #{tpu_custom_call.1} parent=1 // pred_check
      _
    $region15: #{tpu_custom_call.1} parent=1 // pred_check_branch
      %18 = sbr.rel (0) target = $region17
    $region16: #{tpu_custom_call.1} parent=1 // pred_region
      _
    $region17: #{tpu_custom_call.1} parent=1 // pred_fallthru
      _
    // Predicated region
    $region18: #{tpu_custom_call.1} parent=1 // pred_check
      _
    $region19: #{tpu_custom_call.1} parent=1 // pred_check_branch
      %20 = sbr.rel (0) target = $region21
    $region20: #{tpu_custom_call.1} parent=1 // pred_region
      _
    $region21: #{tpu_custom_call.1} parent=1 // pred_fallthru
      _
    %v22 = vld [vmem:[%s1] sm:$0xf]
    %v23 = vld [vmem:[%s1 + $0x4] sm:$0xf]
    %v24 = vld [vmem:[%s1 + $0x8] sm:$0xf]
    %v25 = vld [vmem:[%s1 + $0xc] sm:$0xf]
    %v26 = vld [vmem:[%s0] sm:$0xf]
    %v27 = vld [vmem:[%s0 + $0x4] sm:$0x1]
    %v28 = vld [vmem:[%s2] sm:$0xff]
    %v29 = vld [vmem:[%s2 + $0x8] sm:$0xff]
    %v30 = vld [vmem:[%s2 + $0x10] sm:$0xff]
    %v31 = vld [vmem:[%s2 + $0x18] sm:$0xff]
    %33 = vset.pattern.permute.xlu0 0
    %34 = vperm.xlu0 %33, %v28
    %v35 = vpop.permute.xlu0 %34
    %38 = vset.pattern.permute.xlu0 0
    %39 = vperm.xlu0 %38, %v29
    %v40 = vpop.permute.xlu0 %39
    %43 = vset.pattern.permute.xlu0 0
    %44 = vperm.xlu0 %43, %v30
    %v45 = vpop.permute.xlu0 %44
    %48 = vset.pattern.permute.xlu0 0
    %49 = vperm.xlu0 %48, %v31
    %v50 = vpop.permute.xlu0 %49
    %v56 = vunpack.c.l.b16 %v22
    %v57 = vunpack.c.l.b16 %v23
    %v58 = vunpack.c.l.b16 %v24
    %v59 = vunpack.c.l.b16 %v25
    %v60 = vpack.c.b16 %v57, %v56
    %v61 = vpack.c.b16 %v59, %v58
    %v64 = vunpack.c.l.b16 %v26
    %v65 = vunpack.c.l.b16 %v27
    %v66 = vpack.c.b16 %v65, %v64
    %vm67 = vcmask 72704
    %v69 = vsel %vm67, %v60, 0
    %v72 = vsel %vm67, %v61, 0
    %vm74 = vcmask 1043456
    %vm75 = vcmask 1044480
    %v76 = vsel %vm74, 4294967295, 65535
    %v77 = vsel %vm75, %v76, 0
    %v79 = vand.u32 %v66, %v77
    %81 = vmatprep.subr.bf16.mxu0 0
    %82 = vmatpush1.bf16.msra.mxu0 %v79
    %83 = vmatprep.subr.bf16.mxu0 0
    %84 = vmatpush1.bf16.msra.mxu0 0
    %85 = vmatprep.subr.bf16.mxu0 0
    %86 = vmatpush1.bf16.msra.mxu0 0
    %87 = vmatprep.subr.bf16.mxu0 0
    %88 = vmatpush1.bf16.msra.mxu0 0
    %89 = vmatprep.subr.bf16.mxu0 0
    %90 = vmatpush1.bf16.msra.mxu0 0
    %91 = vmatprep.subr.bf16.mxu0 0
    %92 = vmatpush1.bf16.msra.mxu0 0
    %93 = vmatprep.subr.bf16.mxu0 0
    %94 = vmatpush1.bf16.msra.mxu0 0
    %95 = vmatprep.subr.bf16.mxu0 0
    %96 = vmatpush1.bf16.msra.mxu0 0
    %97 = vmatprep.subr.bf16.mxu0 0
    %98 = vmatpush1.bf16.msra.mxu0 0
    %99 = vmatprep.subr.bf16.mxu0 0
    %100 = vmatpush1.bf16.msra.mxu0 0
    %101 = vmatprep.subr.bf16.mxu0 0
    %102 = vmatpush1.bf16.msra.mxu0 0
    %103 = vmatprep.subr.bf16.mxu0 0
    %104 = vmatpush1.bf16.msra.mxu0 0
    %105 = vmatprep.subr.bf16.mxu0 0
    %106 = vmatpush1.bf16.msra.mxu0 0
    %107 = vmatprep.subr.bf16.mxu0 0
    %108 = vmatpush1.bf16.msra.mxu0 0
    %109 = vmatprep.subr.bf16.mxu0 0
    %110 = vmatpush1.bf16.msra.mxu0 0
    %111 = vmatprep.subr.bf16.mxu0 0
    %112 = vmatpush1.bf16.msra.mxu0 0
    %113 = vmatprep.mubr.bf16.mxu0 0
    %114 = vmatmul.mubr.bf16.gmra.mrb[0].mxu0 %v69
    %v115 = vpop.f32.mrb[0].mxu0
    %v116 = vadd.f32 %v35, %v115
    %v117 = vpop.f32.mrb[0].mxu0
    %v118 = vpop.f32.mrb[0].mxu0
    %v119 = vadd.f32 %v40, %v118
    %v120 = vpop.f32.mrb[0].mxu0
    %121 = vmatprep.mubr.bf16.mxu0 0
    %122 = vmatmul.mubr.bf16.gmra.mrb[0].mxu0 %v72
    %v123 = vpop.f32.mrb[0].mxu0
    %v124 = vadd.f32 %v45, %v123
    %v125 = vpop.f32.mrb[0].mxu0
    %v126 = vpop.f32.mrb[0].mxu0
    %v127 = vadd.f32 %v50, %v126
    %v128 = vpop.f32.mrb[0].mxu0
    %129 = vdwg.mxu0
    %v130 = vmax.f32 %v116, 0.0
    %v131 = vmax.f32 %v119, 0.0
    %v132 = vmax.f32 %v124, 0.0
    %v133 = vmax.f32 %v127, 0.0
    %v134 = vld [vmem:[%s3] sm:$0xf]
    %v135 = vld [vmem:[%s3 + $0x4] sm:$0x1]
    %v136 = vpack.c.bf16 %v131, %v130
    %v137 = vpack.c.bf16 %v133, %v132
    %v138 = vld [vmem:[%s4] sm:$0xff]
    %v139 = vld [vmem:[%s4 + $0x8] sm:$0x1]
    %141 = vset.pattern.permute.xlu0 0
    %142 = vperm.xlu0 %141, %v138
    %v143 = vpop.permute.xlu0 %142
    %146 = vset.pattern.permute.xlu0 0
    %147 = vperm.xlu0 %146, %v139
    %v148 = vpop.permute.xlu0 %147
    %v152 = vunpack.c.l.b16 %v134
    %v153 = vunpack.c.l.b16 %v135
    %v154 = vpack.c.b16 %v153, %v152
    %vm155 = vcmask 261120
    %v157 = vsel %vm155, %v154, 0
    %159 = vmatprep.subr.bf16.mxu0 0
    %160 = vmatpush1.bf16.msra.mxu0 %v136
    %161 = vmatprep.subr.bf16.mxu0 0
    %162 = vmatpush1.bf16.msra.mxu0 %v137
    %163 = vmatprep.subr.bf16.mxu0 0
    %164 = vmatpush1.bf16.msra.mxu0 0
    %165 = vmatprep.subr.bf16.mxu0 0
    %166 = vmatpush1.bf16.msra.mxu0 0
    %167 = vmatprep.subr.bf16.mxu0 0
    %168 = vmatpush1.bf16.msra.mxu0 0
    %169 = vmatprep.subr.bf16.mxu0 0
    %170 = vmatpush1.bf16.msra.mxu0 0
    %171 = vmatprep.subr.bf16.mxu0 0
    %172 = vmatpush1.bf16.msra.mxu0 0
    %173 = vmatprep.subr.bf16.mxu0 0
    %174 = vmatpush1.bf16.msra.mxu0 0
    %175 = vmatprep.subr.bf16.mxu0 0
    %176 = vmatpush1.bf16.msra.mxu0 0
    %177 = vmatprep.subr.bf16.mxu0 0
    %178 = vmatpush1.bf16.msra.mxu0 0
    %179 = vmatprep.subr.bf16.mxu0 0
    %180 = vmatpush1.bf16.msra.mxu0 0
    %181 = vmatprep.subr.bf16.mxu0 0
    %182 = vmatpush1.bf16.msra.mxu0 0
    %183 = vmatprep.subr.bf16.mxu0 0
    %184 = vmatpush1.bf16.msra.mxu0 0
    %185 = vmatprep.subr.bf16.mxu0 0
    %186 = vmatpush1.bf16.msra.mxu0 0
    %187 = vmatprep.subr.bf16.mxu0 0
    %188 = vmatpush1.bf16.msra.mxu0 0
    %189 = vmatprep.subr.bf16.mxu0 0
    %190 = vmatpush1.bf16.msra.mxu0 0
    %191 = vmatprep.mubr.bf16.mxu0 0
    %192 = vmatmul.mubr.bf16.gmra.mrb[0].mxu0 %v157
    %v193 = vpop.f32.mrb[0].mxu0
    %v194 = vadd.f32 %v143, %v193
    %v195 = vpop.f32.mrb[0].mxu0
    %v196 = vpop.f32.mrb[0].mxu0
    %v197 = vadd.f32 %v148, %v196
    %v198 = vpop.f32.mrb[0].mxu0
    %199 = vdwg.mxu0
    %200 = vst [vmem:[#allocation2] sm:$0xff] %v194
    %201 = vst [vmem:[#allocation2 + $0x8] sm:$0x1] %v197
    // Predicated region
    $region22: #{tpu_custom_call.1} parent=1 // pred_check
      _
    $region23: #{tpu_custom_call.1} parent=1 // pred_check_branch
      %203 = sbr.rel (0) target = $region25
    $region24: #{tpu_custom_call.1} parent=1 // pred_region
      %s205 = ssub.s32 256, 256
      %206 = vsyncadd [#allocation3], %s205
      %s207 = sshll.u32 [#allocation2], 4
      %s208 = int_to_ptr.vmem [resolvable:$true] %s207
      %213 = dma.vmem_to_hbm [thread:$0]  %s208, 256, %s5, [#allocation3], 128, 128, 8
    $region25: #{tpu_custom_call.1} parent=1 // pred_fallthru
      _
    // Predicated region
    $region26: #{tpu_custom_call.1} parent=1 // pred_check
      _
    $region27: #{tpu_custom_call.1} parent=1 // pred_check_branch
      %215 = sbr.rel (0) target = $region29
    $region28: #{tpu_custom_call.1} parent=1 // pred_region
      %216 = dma.done [#allocation3], 256
    $region29: #{tpu_custom_call.1} parent=1 // pred_fallthru
      _
    %217 = vsyncpa [#allocation3], 1

</llo_original>
